<compile_context>
chip_gen: v7x
topology: tpu7x:2x2x1
jax: 0.10.0
libtpu: 0.0.40
codegen_flags: <defaults>
</compile_context>

<pallas_src>
import functools
import math

import jax
import jax.numpy as jnp
from jax.experimental import pallas as pl
from jax.experimental.pallas import tpu as pltpu


# ---------------------------------------------------------------------------
# Pallas kernel: tiled matmul with fused bias add and optional ReLU epilogue.
# x/w tiles arrive as bf16; accumulation and epilogue are f32.
# ---------------------------------------------------------------------------
def _matmul_bias_kernel(x_ref, w_ref, b_ref, o_ref, acc_ref, *, relu):
    k = pl.program_id(2)

    @pl.when(k == 0)
    def _():
        acc_ref[...] = jnp.zeros_like(acc_ref)

    acc_ref[...] += jnp.dot(x_ref[...], w_ref[...],
                            preferred_element_type=jnp.float32)

    @pl.when(k == pl.num_programs(2) - 1)
    def _():
        out = acc_ref[...] + b_ref[...]          # f32 epilogue on the VPU
        if relu:
            out = jnp.maximum(out, 0.0)
        o_ref[...] = out.astype(o_ref.dtype)


# ---------------------------------------------------------------------------
# Pallas wrapper
# ---------------------------------------------------------------------------
def _round_up(x, m):
    return (x + m - 1) // m * m


def _pick_tile(dim_padded, cap):
    """Largest multiple of 128 that divides dim_padded (itself a x128) and is <= cap."""
    best = 128
    t = 128
    while t <= min(cap, dim_padded):
        if dim_padded % t == 0:
            best = t
        t += 128
    return best


def matmul_bias_act(x, w, b, *, relu):
    """y = x @ w + b (optionally ReLU).  x:(M,K), w:(K,N), b:(N,).

    x and w are cast to bf16 (no-op if already bf16); output is f32."""
    M, K = x.shape
    K2, N = w.shape
    assert K == K2

    x = x.astype(jnp.bfloat16)
    w = w.astype(jnp.bfloat16)
    b = b.astype(jnp.float32)

    # Pad the reduction / output dims only to 128, then pick tiles that divide
    # the padded dims exactly (no over-padding of K).
    Kp = _round_up(K, 128)
    Np = _round_up(N, 128)

    if M <= 16:
        # Weight-streaming FC case (M = batch): big weight tiles, few grid steps.
        tk_cap, tn_cap = 2048, 1024
    else:
        tk_cap, tn_cap = 2048, 512
    tk = _pick_tile(Kp, tk_cap)
    tn = _pick_tile(Np, tn_cap)

    tm = min(128, _round_up(M, 8))
    Mp = _round_up(M, tm)

    xp = jnp.pad(x, ((0, Mp - M), (0, Kp - K)))
    wp = jnp.pad(w, ((0, Kp - K), (0, Np - N)))
    bp = jnp.pad(b, ((0, Np - N),)).reshape(1, Np)

    grid = (Mp // tm, Np // tn, Kp // tk)

    out = pl.pallas_call(
        functools.partial(_matmul_bias_kernel, relu=relu),
        out_shape=jax.ShapeDtypeStruct((Mp, Np), jnp.float32),
        grid_spec=pltpu.PrefetchScalarGridSpec(
            num_scalar_prefetch=0,
            grid=grid,
            in_specs=[
                pl.BlockSpec((tm, tk), lambda i, j, k: (i, k)),
                pl.BlockSpec((tk, tn), lambda i, j, k: (k, j)),
                # Bias block index is constant over the inner k sweep, so the
                # pipeline does not re-DMA it per k step.
                pl.BlockSpec((1, tn), lambda i, j, k: (0, j)),
            ],
            out_specs=pl.BlockSpec((tm, tn), lambda i, j, k: (i, j)),
            scratch_shapes=[pltpu.VMEM((tm, tn), jnp.float32)],
        ),
        compiler_params=pltpu.CompilerParams(
            dimension_semantics=("parallel", "parallel", "arbitrary")),
    )(xp, wp, bp)
    return out[:M, :N]


# ---------------------------------------------------------------------------
# Conv / pool helpers (plain-JAX glue around the Pallas matmul)
# ---------------------------------------------------------------------------
def _im2col(x, kh, kw, stride, pad):
    """x: NHWC -> (N*OH*OW, kh*kw*C) patches, ordering (kh, kw, c)."""
    N, H, W, C = x.shape
    xp = jnp.pad(x, ((0, 0), (pad, pad), (pad, pad), (0, 0)))
    OH = (H + 2 * pad - kh) // stride + 1
    OW = (W + 2 * pad - kw) // stride + 1
    cols = []
    for i in range(kh):
        for j in range(kw):
            patch = jax.lax.slice(
                xp,
                (0, i, j, 0),
                (N, i + stride * (OH - 1) + 1, j + stride * (OW - 1) + 1, C),
                (1, stride, stride, 1))
            cols.append(patch)  # (N, OH, OW, C)
    patches = jnp.concatenate(cols, axis=-1)  # (N, OH, OW, kh*kw*C)
    return patches.reshape(N * OH * OW, kh * kw * C), OH, OW


def conv2d_relu(x, wm, b, *, kh, kw, stride, pad):
    """NHWC conv (torch cross-correlation semantics) + bias + ReLU.

    wm is pre-reshaped to (kh*kw*Cin, Cout) in bf16 (see prepare_params)."""
    cout = wm.shape[1]
    N = x.shape[0]
    # Emit im2col patches directly in bf16 (halves patch HBM traffic).
    cols, OH, OW = _im2col(x.astype(jnp.bfloat16), kh, kw, stride, pad)
    out = matmul_bias_act(cols, wm, b, relu=True)  # (N*OH*OW, Cout) f32
    return out.reshape(N, OH, OW, cout)


def maxpool2d(x, *, k=3, s=2):
    """NHWC max pooling via fused chained maxima over strided slices (no HBM blow-up)."""
    N, H, W, C = x.shape
    OH = (H - k) // s + 1
    OW = (W - k) // s + 1
    out = None
    for i in range(k):
        for j in range(k):
            v = jax.lax.slice(
                x,
                (0, i, j, 0),
                (N, i + s * (OH - 1) + 1, j + s * (OW - 1) + 1, C),
                (1, s, s, 1))
            out = v if out is None else jnp.maximum(out, v)
    return out


def adaptive_avg_pool_6x6(x):
    """NHWC adaptive average pool to (6, 6), matching PyTorch window math."""
    N, H, W, C = x.shape
    if H == 6 and W == 6:
        return x
    if H == 1 and W == 1:
        return jnp.broadcast_to(x, (N, 6, 6, C))
    if H % 6 == 0 and W % 6 == 0:
        return x.reshape(N, 6, H // 6, 6, W // 6, C).mean(axis=(2, 4))
    # General PyTorch-exact fallback (rare shapes).
    rows = []
    for i in range(6):
        h0 = (i * H) // 6
        h1 = math.ceil((i + 1) * H / 6)
        cols = []
        for j in range(6):
            w0 = (j * W) // 6
            w1 = math.ceil((j + 1) * W / 6)
            cols.append(jnp.mean(x[:, h0:h1, w0:w1, :], axis=(1, 2)))
        rows.append(jnp.stack(cols, axis=1))  # (N, 6, C)
    return jnp.stack(rows, axis=1)  # (N, 6, 6, C)


# ---------------------------------------------------------------------------
# Parameter init (deterministic, PyTorch-default-like uniform fan-in init)
# and one-time preparation into kernel layout (bf16, pre-transposed).
# ---------------------------------------------------------------------------
def init_params(key, num_classes=1000):
    def conv_init(k, cout, cin, kh, kw):
        k1, k2 = jax.random.split(k)
        bound = 1.0 / math.sqrt(cin * kh * kw)
        w = jax.random.uniform(k1, (cout, cin, kh, kw), jnp.float32, -bound, bound)
        b = jax.random.uniform(k2, (cout,), jnp.float32, -bound, bound)
        return w, b

    def linear_init(k, dout, din):
        k1, k2 = jax.random.split(k)
        bound = 1.0 / math.sqrt(din)
        w = jax.random.uniform(k1, (dout, din), jnp.float32, -bound, bound)
        b = jax.random.uniform(k2, (dout,), jnp.float32, -bound, bound)
        return w, b

    keys = jax.random.split(key, 8)
    p = {}
    p["conv1"] = conv_init(keys[0], 64, 3, 11, 11)
    p["conv2"] = conv_init(keys[1], 192, 64, 5, 5)
    p["conv3"] = conv_init(keys[2], 384, 192, 3, 3)
    p["conv4"] = conv_init(keys[3], 256, 384, 3, 3)
    p["conv5"] = conv_init(keys[4], 256, 256, 3, 3)
    p["fc1"] = linear_init(keys[5], 4096, 256 * 6 * 6)
    p["fc2"] = linear_init(keys[6], 4096, 4096)
    p["fc3"] = linear_init(keys[7], num_classes, 4096)
    return p


def prepare_params(params):
    """One-time conversion of PyTorch-layout params to kernel layout.

    Conv weights (Cout,Cin,kh,kw) -> (kh*kw*Cin, Cout) bf16 (im2col column
    ordering); FC weights (Dout,Din) -> (Din,Dout) bf16.  Biases stay f32.
    Removes every per-forward transpose/reshape of weights."""
    prepped = {}
    for name in ("conv1", "conv2", "conv3", "conv4", "conv5"):
        w, b = params[name]
        cout, cin, kh, kw = w.shape
        wm = jnp.transpose(w, (2, 3, 1, 0)).reshape(kh * kw * cin, cout)
        prepped[name] = (wm.astype(jnp.bfloat16), b.astype(jnp.float32),
                         (kh, kw))
    for name in ("fc1", "fc2", "fc3"):
        w, b = params[name]
        prepped[name] = (jnp.transpose(w, (1, 0)).astype(jnp.bfloat16),
                         b.astype(jnp.float32))
    return prepped


# ---------------------------------------------------------------------------
# Forward pass (matches AlexNet.forward, eval mode)
# ---------------------------------------------------------------------------
def alexnet_forward(prepped, x_nchw):
    # NCHW (PyTorch) -> NHWC (kernel layout)
    x = jnp.transpose(x_nchw, (0, 2, 3, 1))

    # features
    w, b, (kh, kw) = prepped["conv1"]
    x = conv2d_relu(x, w, b, kh=kh, kw=kw, stride=4, pad=2)
    x = maxpool2d(x, k=3, s=2)
    w, b, (kh, kw) = prepped["conv2"]
    x = conv2d_relu(x, w, b, kh=kh, kw=kw, stride=1, pad=2)
    x = maxpool2d(x, k=3, s=2)
    w, b, (kh, kw) = prepped["conv3"]
    x = conv2d_relu(x, w, b, kh=kh, kw=kw, stride=1, pad=1)
    w, b, (kh, kw) = prepped["conv4"]
    x = conv2d_relu(x, w, b, kh=kh, kw=kw, stride=1, pad=1)
    w, b, (kh, kw) = prepped["conv5"]
    x = conv2d_relu(x, w, b, kh=kh, kw=kw, stride=1, pad=1)
    x = maxpool2d(x, k=3, s=2)

    # avgpool + flatten (flatten in NCHW order to match torch.flatten(x, 1))
    x = adaptive_avg_pool_6x6(x)                                 # (N, 6, 6, 256)
    x = jnp.transpose(x, (0, 3, 1, 2)).reshape(x.shape[0], -1)   # (N, 9216)

    # classifier (Dropout == identity in eval mode)
    w1, b1 = prepped["fc1"]
    x = matmul_bias_act(x, w1, b1, relu=True)
    w2, b2 = prepped["fc2"]
    x = matmul_bias_act(x, w2, b2, relu=True)
    w3, b3 = prepped["fc3"]
    x = matmul_bias_act(x, w3, b3, relu=False)
    return x


if __name__ == "__main__":
    num_classes = 1000
    key = jax.random.PRNGKey(0)
    k_param, k_input = jax.random.split(key)

    params = init_params(k_param, num_classes=num_classes)
    prepped = prepare_params(params)   # one-time weight layout/dtype prep

    # Small input (NCHW, like PyTorch): batch=2, channels=3, spatial=63x63
    # (smallest spatial size that survives AlexNet's three pools).
    x = jax.random.normal(k_input, (2, 3, 63, 63), dtype=jnp.float32)

    out = alexnet_forward(prepped, x)
    out = jax.block_until_ready(out)

    assert out.shape == (2, num_classes), out.shape
    assert out.dtype == jnp.float32
    print("KERNEL_OK")
</pallas_src>

<mosaic_0001>
module attributes {stable_mosaic.version = 11 : i64} {
  func.func @_matmul_bias_kernel(%arg0: i32, %arg1: i32, %arg2: i32, %arg3: memref<128x384xbf16, #tpu.memory_space<vmem>>, %arg4: memref<384x128xbf16, #tpu.memory_space<vmem>>, %arg5: memref<1x128xf32, #tpu.memory_space<vmem>>, %arg6: memref<128x128xf32, #tpu.memory_space<vmem>>, %arg7: memref<128x128xf32, #tpu.memory_space<vmem>>) attributes {dimension_semantics = [#tpu.dimension_semantics<parallel>, #tpu.dimension_semantics<parallel>, #tpu.dimension_semantics<arbitrary>], iteration_bounds = array<i64: 4, 1, 1>, scalar_prefetch = 0 : i64, scratch_operands = 1 : i64, tpu.core_type = #tpu.core_type<tc>, window_params = [{transform_indices = @transform_0, window_bounds = array<i64: 128, 384>}, {transform_indices = @transform_1, window_bounds = array<i64: 384, 128>}, {transform_indices = @transform_2, window_bounds = array<i64: 1, 128>}, {transform_indices = @transform_3, window_bounds = array<i64: 128, 128>}]} {
    %c0_i32 = arith.constant 0 : i32
    %0 = arith.cmpi eq, %arg2, %c0_i32 : i32
    %1 = arith.extui %0 : i1 to i32
    %c0_i32_0 = arith.constant 0 : i32
    %2 = arith.cmpi ne, %1, %c0_i32_0 : i32
    scf.if %2 {
      %cst_10 = arith.constant 0.000000e+00 : f32
      %12 = vector.broadcast %cst_10 : f32 to vector<128x128xf32>
      %c0_11 = arith.constant 0 : index
      %c0_12 = arith.constant 0 : index
      %13 = vector.load %arg7[%c0_11, %c0_12] : memref<128x128xf32, #tpu.memory_space<vmem>>, vector<128x128xf32>
      tpu.vector_store %arg7[%c0_11, %c0_12], %12 {strides = array<i32>} : memref<128x128xf32, #tpu.memory_space<vmem>>, vector<128x128xf32>,
    } else {
    }
    %c0 = arith.constant 0 : index
    %c0_1 = arith.constant 0 : index
    %3 = vector.load %arg7[%c0, %c0_1] : memref<128x128xf32, #tpu.memory_space<vmem>>, vector<128x128xf32>
    %c0_2 = arith.constant 0 : index
    %c0_3 = arith.constant 0 : index
    %4 = vector.load %arg3[%c0_2, %c0_3] : memref<128x384xbf16, #tpu.memory_space<vmem>>, vector<128x384xbf16>
    %c0_4 = arith.constant 0 : index
    %c0_5 = arith.constant 0 : index
    %5 = vector.load %arg4[%c0_4, %c0_5] : memref<384x128xbf16, #tpu.memory_space<vmem>>, vector<384x128xbf16>
    %cst = arith.constant dense<0.000000e+00> : vector<128x128xf32>
    %6 = tpu.matmul %4, %5, %cst {dimension_numbers = #tpu.dot_dimension_numbers<[1], [0], [0], [1], [0, 0, 1, 1], [], []>} : vector<128x384xbf16>, vector<384x128xbf16>, vector<128x128xf32> -> vector<128x128xf32>
    %7 = arith.addf %3, %6 : vector<128x128xf32>
    %c0_6 = arith.constant 0 : index
    %c0_7 = arith.constant 0 : index
    %8 = vector.load %arg7[%c0_6, %c0_7] : memref<128x128xf32, #tpu.memory_space<vmem>>, vector<128x128xf32>
    tpu.vector_store %arg7[%c0_6, %c0_7], %7 {strides = array<i32>} : memref<128x128xf32, #tpu.memory_space<vmem>>, vector<128x128xf32>,
    %c0_i32_8 = arith.constant 0 : i32
    %9 = arith.cmpi eq, %arg2, %c0_i32_8 : i32
    %10 = arith.extui %9 : i1 to i32
    %c0_i32_9 = arith.constant 0 : i32
    %11 = arith.cmpi ne, %10, %c0_i32_9 : i32
    scf.if %11 {
      %c0_10 = arith.constant 0 : index
      %c0_11 = arith.constant 0 : index
      %12 = vector.load %arg7[%c0_10, %c0_11] : memref<128x128xf32, #tpu.memory_space<vmem>>, vector<128x128xf32>
      %c0_12 = arith.constant 0 : index
      %c0_13 = arith.constant 0 : index
      %13 = vector.load %arg5[%c0_12, %c0_13] : memref<1x128xf32, #tpu.memory_space<vmem>>, vector<1x128xf32>
      %14 = vector.broadcast %13 : vector<1x128xf32> to vector<128x128xf32>
      %15 = arith.addf %12, %14 : vector<128x128xf32>
      %cst_14 = arith.constant 0.000000e+00 : f32
      %16 = vector.broadcast %cst_14 : f32 to vector<128x128xf32>
      %17 = arith.maximumf %15, %16 : vector<128x128xf32>
      %c0_15 = arith.constant 0 : index
      %c0_16 = arith.constant 0 : index
      %18 = vector.load %arg6[%c0_15, %c0_16] : memref<128x128xf32, #tpu.memory_space<vmem>>, vector<128x128xf32>
      tpu.vector_store %arg6[%c0_15, %c0_16], %17 {strides = array<i32>} : memref<128x128xf32, #tpu.memory_space<vmem>>, vector<128x128xf32>,
    } else {
    }
    return
  }
  func.func @transform_0(%arg0: i32, %arg1: i32, %arg2: i32) -> (i32, i32) {
    %c0_i32 = arith.constant 0 : i32
    return %arg0, %arg2 : i32, i32
  }
  func.func @transform_1(%arg0: i32, %arg1: i32, %arg2: i32) -> (i32, i32) {
    %c0_i32 = arith.constant 0 : i32
    return %arg2, %arg1 : i32, i32
  }
  func.func @transform_2(%arg0: i32, %arg1: i32, %arg2: i32) -> (i32, i32) {
    %c0_i32 = arith.constant 0 : i32
    %c0_i32_0 = arith.constant 0 : i32
    return %c0_i32, %arg1 : i32, i32
  }
  func.func @transform_3(%arg0: i32, %arg1: i32, %arg2: i32) -> (i32, i32) {
    %c0_i32 = arith.constant 0 : i32
    return %arg0, %arg1 : i32, i32
  }
}

</mosaic_0001>

<llo_original>
// kernel: tpu_custom_call.1
$region0: #{tpu_custom_call.1}
  #allocation0 [shape = 'u32[]', space=smem, size = 0x4, offset = 0x4, fixed_abs, tag = 'smem constant byte address 0x4 - core index']
  #allocation1 [shape = 'u32[144,128]{1,0:T(1,128)}', space=vmem, size = 0x12000, scoped, tag = 'internal scratch']
  #allocation2 [shape = 'f32[128,128]{1,0:T(8,128)}', space=vmem, size = 0x10000, scoped, tag = 'scratch operand']
  %s0 = inlined_call_operand.hbm [shape: bf16[512,384], index: 0, kind: input, shape index: {}]
  %s1 = inlined_call_operand.hbm [shape: bf16[384,128], index: 1, kind: input, shape index: {}]
  %s2 = inlined_call_operand.vmem [shape: f32[1,128], index: 2, kind: input, shape index: {}]
  %s3 = inlined_call_operand.hbm [shape: f32[512,128], index: 3, kind: output, shape index: {}]
  %s4 = sld [smem:[#allocation0]]
  $region61: #{tpu_custom_call.1} parent=0
    _
  %s6 = ssub.s32 1, %s4
  %s7 = scalar_select 0, %s6, %s4
  $region1: #{tpu_custom_call.1} parent=0
    #allocation3 [shape = 'u8[196608]{0}', space=vmem, size = 0x30000, scoped, tag = 'input window, operand 0']
    #allocation4 [shape = 's32[2]{0}', space=sflag, size = 0x8, scoped, tag = 'scoped memory for tpu_custom_call.1']
    #allocation5 [shape = 's32[2]{0}', space=sflag, size = 0x8, scoped, tag = 'scoped memory for tpu_custom_call.1']
    #allocation6 [shape = 'u8[98304]{0}', space=vmem, size = 0x18000, scoped, tag = 'input window, operand 1, single buffered']
    #allocation7 [shape = 's32[1]{0}', space=sflag, size = 0x4, scoped, tag = 'scoped memory for tpu_custom_call.1']
    #allocation8 [shape = 'u8[131072]{0}', space=vmem, size = 0x20000, scoped, tag = 'output window, operand 0']
    %8 = vsyncpa [#allocation4], 0
    %s9 = scalar_lea.sflag [#allocation4], 1
    %10 = vsyncpa %s9, 0
    %11 = vsyncpa [#allocation7], 0
    %12 = vsyncpa [#allocation5], 0
    %s13 = scalar_lea.sflag [#allocation5], 1
    %14 = vsyncpa %s13, 0
    loop: start=0, step=1, limit=6
    $region2: #{tpu_custom_call.1} parent=1 // loop_pre_header
      _
    $region3: #{tpu_custom_call.1} parent=1 // loop_header
      %s16 = sphi 0, %s20
      %p17 = scmp.ge.s32.totalorder %s16, 6
      %s23 = sphi 0, %s42
      %s24 = sphi 0, %s38
      %s25 = sphi 0, %s34
      %s26 = sphi 0, %s23
      %s27 = sphi 0, %s24
      %s28 = sphi 0, %s25
      %s29 = sphi 0, %s26
      %s30 = sphi 0, %s27
      %s31 = sphi 0, %s28
      %s47 = sphi 0, %s49
      %s50 = sphi 0, %s47
      %s51 = sphi 0, %s50
      %s67 = sphi 0, %s51
      %s75 = sphi 0, %s77
      %s78 = sphi 0, %s75
      %s79 = sphi 0, %s78
      %s95 = sphi 0, %s79
      %s101 = sphi 0, %s103
      %s104 = sphi 0, %s101
      %s105 = sphi 0, %s104
      %s121 = sphi 0, %s105
      %s129 = sphi 0, %s131
      %s132 = sphi 0, %s129
      %s133 = sphi 0, %s132
      %s149 = sphi 0, %s133
    $region4: #{tpu_custom_call.1} parent=1 // loop_header_branch
      %19 = sbr.rel (%p17) target = $region8
    $region5: #{tpu_custom_call.1} parent=1 // loop_body
      %s21 = ssub.s32 %s16, 1
      %s22 = ssub.s32 %s16, 2
      %s32 = sadd.s32 1, %s25
      %p33 = scmp.ge.s32.totalorder %s32, 1
      %s34 = scalar_select %p33, 0, %s32
      %s35 = sadd.s32 1, %s24
      %s36 = scalar_select %p33, %s35, %s24
      %p37 = scmp.ge.s32.totalorder %s36, 1
      %s38 = scalar_select %p37, 0, %s36
      %s39 = sadd.s32 1, %s23
      %s40 = scalar_select %p37, %s39, %s23
      %p41 = scmp.ge.s32.totalorder %s40, 4
      %s42 = scalar_select %p41, 0, %s40
      %s43 = ssub.s32 %s23, %s42
      %s44 = ssub.s32 %s25, %s34
      %s45 = sor.u32 %s43, %s44
      %p46 = scmp.eq.s32.totalorder %s45, 0
      %s48 = sadd.s32 %s47, 1
      %s49 = scalar_select %p46, %s47, %s48
      %p52 = pneg %p46
      %p53 = scmp.eq.s32.totalorder %s16, 3
      %p54 = por %p52, %p53
      %p55 = scmp.ne.s32.totalorder %s47, %s50
      %p56 = scmp.eq.s32.totalorder %s16, 0
      %p57 = por %p55, %p56
      %p58 = scmp.ne.s32.totalorder %s47, %s50
      %p59 = scmp.eq.s32.totalorder %s21, 3
      %p60 = por %p58, %p59
      %p61 = scmp.ne.s32.totalorder %s50, %s51
      %p62 = scmp.eq.s32.totalorder %s21, 0
      %p63 = por %p61, %p62
      %p64 = scmp.ne.s32.totalorder %s50, %s51
      %p65 = scmp.eq.s32.totalorder %s22, 3
      %p66 = por %p64, %p65
      %p68 = scmp.ne.s32.totalorder %s51, %s67
      %p69 = scmp.eq.s32.totalorder %s22, 0
      %p70 = por %p68, %p69
      %s71 = ssub.s32 %s25, %s34
      %s72 = ssub.s32 %s24, %s38
      %s73 = sor.u32 %s71, %s72
      %p74 = scmp.eq.s32.totalorder %s73, 0
      %s76 = sadd.s32 %s75, 1
      %s77 = scalar_select %p74, %s75, %s76
      %p80 = pneg %p74
      %p81 = scmp.eq.s32.totalorder %s16, 3
      %p82 = por %p80, %p81
      %p83 = scmp.ne.s32.totalorder %s75, %s78
      %p84 = scmp.eq.s32.totalorder %s16, 0
      %p85 = por %p83, %p84
      %p86 = scmp.ne.s32.totalorder %s75, %s78
      %p87 = scmp.eq.s32.totalorder %s21, 3
      %p88 = por %p86, %p87
      %p89 = scmp.ne.s32.totalorder %s78, %s79
      %p90 = scmp.eq.s32.totalorder %s21, 0
      %p91 = por %p89, %p90
      %p92 = scmp.ne.s32.totalorder %s78, %s79
      %p93 = scmp.eq.s32.totalorder %s22, 3
      %p94 = por %p92, %p93
      %p96 = scmp.ne.s32.totalorder %s79, %s95
      %p97 = scmp.eq.s32.totalorder %s22, 0
      %p98 = por %p96, %p97
      %s99 = ssub.s32 %s24, %s38
      %p100 = scmp.eq.s32.totalorder %s99, 0
      %s102 = sadd.s32 %s101, 1
      %s103 = scalar_select %p100, %s101, %s102
      %p106 = pneg %p100
      %p107 = scmp.eq.s32.totalorder %s16, 3
      %p108 = por %p106, %p107
      %p109 = scmp.ne.s32.totalorder %s101, %s104
      %p110 = scmp.eq.s32.totalorder %s16, 0
      %p111 = por %p109, %p110
      %p112 = scmp.ne.s32.totalorder %s101, %s104
      %p113 = scmp.eq.s32.totalorder %s21, 3
      %p114 = por %p112, %p113
      %p115 = scmp.ne.s32.totalorder %s104, %s105
      %p116 = scmp.eq.s32.totalorder %s21, 0
      %p117 = por %p115, %p116
      %p118 = scmp.ne.s32.totalorder %s104, %s105
      %p119 = scmp.eq.s32.totalorder %s22, 3
      %p120 = por %p118, %p119
      %p122 = scmp.ne.s32.totalorder %s105, %s121
      %p123 = scmp.eq.s32.totalorder %s22, 0
      %p124 = por %p122, %p123
      %s125 = ssub.s32 %s23, %s42
      %s126 = ssub.s32 %s24, %s38
      %s127 = sor.u32 %s125, %s126
      %p128 = scmp.eq.s32.totalorder %s127, 0
      %s130 = sadd.s32 %s129, 1
      %s131 = scalar_select %p128, %s129, %s130
      %p134 = pneg %p128
      %p135 = scmp.eq.s32.totalorder %s16, 3
      %p136 = por %p134, %p135
      %p137 = scmp.ne.s32.totalorder %s129, %s132
      %p138 = scmp.eq.s32.totalorder %s16, 0
      %p139 = por %p137, %p138
      %p140 = scmp.ne.s32.totalorder %s129, %s132
      %p141 = scmp.eq.s32.totalorder %s21, 3
      %p142 = por %p140, %p141
      %p143 = scmp.ne.s32.totalorder %s132, %s133
      %p144 = scmp.eq.s32.totalorder %s21, 0
      %p145 = por %p143, %p144
      %p146 = scmp.ne.s32.totalorder %s132, %s133
      %p147 = scmp.eq.s32.totalorder %s22, 3
      %p148 = por %p146, %p147
      %p150 = scmp.ne.s32.totalorder %s133, %s149
      %p151 = scmp.eq.s32.totalorder %s22, 0
      %p152 = por %p150, %p151
      %p153 = scmp.le.s32.totalorder 1, %s16
      %p154 = scmp.lt.s32.totalorder %s16, 5
      %p155 = pnand %p153, %p154
      %p156 = pneg %p155
      // Predicated region
      $region9: #{tpu_custom_call.1} parent=5 // pred_check
        _
      $region10: #{tpu_custom_call.1} parent=5 // pred_check_branch
        %158 = sbr.rel (%p155) target = $region12
      $region11: #{tpu_custom_call.1} parent=5 // pred_region
        %s159 = ssub.s32 %s16, 1
        // Predicated region
        $region13: #{tpu_custom_call.1} parent=11 // pred_check
          %p160 = pneg %p91
        $region14: #{tpu_custom_call.1} parent=11 // pred_check_branch
          %162 = sbr.rel (%p160) target = $region16
        $region15: #{tpu_custom_call.1} parent=11 // pred_region
          %s163 = smul.u32 48, %s28
          %s165 = ssub.s32 3072, 3072
          %166 = vsyncadd [#allocation7], %s165
          %s167 = sadd.s32 %s27, %s163
          %s168 = smul.addr %s167, 64
          %s169 = scalar_lea.hbm %s1, %s168
          %s170 = sshll.u32 [#allocation6], 4
          %s171 = int_to_ptr.vmem [resolvable:$true] %s170
          %176 = dma.hbm_to_vmem [thread:$0]  %s169, 3072, %s171, [#allocation7], 64, 64, 4
        $region16: #{tpu_custom_call.1} parent=11 // pred_fallthru
          _
        // Predicated region
        $region17: #{tpu_custom_call.1} parent=11 // pred_check
          %p177 = pneg %p117
        $region18: #{tpu_custom_call.1} parent=11 // pred_check_branch
          %179 = sbr.rel (%p177) target = $region20
        $region19: #{tpu_custom_call.1} parent=11 // pred_region
          %p180 = scmp.lt.s32.totalorder %s27, 0
          %s181 = scalar_select %p180, %s27, 0
          %s182 = scalar_lea.vmem %s2, %s181
        $region20: #{tpu_custom_call.1} parent=11 // pred_fallthru
          _
      $region12: #{tpu_custom_call.1} parent=5 // pred_fallthru
        _
      %p183 = scmp.lt.s32.totalorder %s16, 4
      // Predicated region
      $region21: #{tpu_custom_call.1} parent=5 // pred_check
        %p184 = pneg %p183
      $region22: #{tpu_custom_call.1} parent=5 // pred_check_branch
        %186 = sbr.rel (%p184) target = $region24
      $region23: #{tpu_custom_call.1} parent=5 // pred_region
        // Predicated region
        $region25: #{tpu_custom_call.1} parent=23 // pred_check
          %p187 = pneg %p57
        $region26: #{tpu_custom_call.1} parent=23 // pred_check_branch
          %189 = sbr.rel (%p187) target = $region28
        $region27: #{tpu_custom_call.1} parent=23 // pred_region
          %s190 = sand.u32 %s47, 1
          %s191 = scalar_lea.sflag [#allocation4], %s190
          %s192 = sand.u32 %s47, 1
          %s193 = smul.addr %s192, 192
          %s194 = scalar_lea.vmem [#allocation3], %s193
          %s195 = smul.u32 16, %s23
          %s196 = smul.u32 3, %s25
          %s198 = ssub.s32 3072, 3072
          %199 = vsyncadd %s191, %s198
          %s200 = smul.addr %s195, 3
          %s201 = sadd.s32 %s196, %s200
          %s202 = smul.addr %s201, 64
          %s203 = scalar_lea.hbm %s0, %s202
          %s204 = sshll.u32 %s194, 4
          %s205 = int_to_ptr.vmem [resolvable:$true] %s204
          %210 = dma.hbm_to_vmem [thread:$0]  %s203, 3072, %s205, %s191, 192, 192, 12
        $region28: #{tpu_custom_call.1} parent=23 // pred_fallthru
          _
      $region24: #{tpu_custom_call.1} parent=5 // pred_fallthru
        _
      %p211 = scmp.le.s32.totalorder 1, %s16
      %p212 = scmp.lt.s32.totalorder %s16, 5
      %p213 = pnand %p211, %p212
      %p214 = pneg %p213
      // Predicated region
      $region29: #{tpu_custom_call.1} parent=5 // pred_check
        _
      $region30: #{tpu_custom_call.1} parent=5 // pred_check_branch
        %216 = sbr.rel (%p213) target = $region32
      $region31: #{tpu_custom_call.1} parent=5 // pred_region
        %s217 = ssub.s32 %s16, 1
        %s218 = sand.u32 %s50, 1
        %s219 = scalar_lea.sflag [#allocation4], %s218
        %s220 = sand.u32 %s50, 1
        %s221 = smul.addr %s220, 192
        %s222 = scalar_lea.vmem [#allocation3], %s221
        // Predicated region
        $region33: #{tpu_custom_call.1} parent=31 // pred_check
          %p223 = pneg %p63
        $region34: #{tpu_custom_call.1} parent=31 // pred_check_branch
          %225 = sbr.rel (%p223) target = $region36
        $region35: #{tpu_custom_call.1} parent=31 // pred_region
          %226 = dma.done %s219, 3072
        $region36: #{tpu_custom_call.1} parent=31 // pred_fallthru
          _
        // Predicated region
        $region37: #{tpu_custom_call.1} parent=31 // pred_check
          %p227 = pneg %p91
        $region38: #{tpu_custom_call.1} parent=31 // pred_check_branch
          %229 = sbr.rel (%p227) target = $region40
        $region39: #{tpu_custom_call.1} parent=31 // pred_region
          %230 = dma.done [#allocation7], 3072
        $region40: #{tpu_custom_call.1} parent=31 // pred_fallthru
          _
        %s231 = sand.u32 %s50, 1
        %s232 = scalar_lea.sflag [#allocation4], %s231
        %s233 = sand.u32 %s50, 1
        %s234 = smul.addr %s233, 192
        %s235 = scalar_lea.vmem [#allocation3], %s234
        %p236 = pneg %p63
        %p237 = pneg %p60
        %p238 = pneg %p91
        %p239 = pneg %p88
        %p240 = scmp.lt.s32.totalorder %s27, 0
        %s241 = scalar_select %p240, %s27, 0
        %s242 = scalar_lea.vmem %s2, %s241
        %p243 = pneg %p117
        %p244 = pneg %p114
        %p245 = pneg %p145
        %p246 = pneg %p142
        %s247 = sand.u32 %s132, 1
        %s248 = scalar_lea.sflag [#allocation5], %s247
        %s249 = sand.u32 %s132, 1
        %s250 = smul.addr %s249, 128
        %s251 = scalar_lea.vmem [#allocation8], %s250
        %s252 = smul.u32 16, %s26
        %s253 = smul.u32 3, %s28
        %s254 = smul.u32 48, %s28
        %p255 = scmp.lt.s32.totalorder %s27, 0
        %s256 = scalar_select %p255, %s27, 0
        %s257 = scalar_lea.vmem %s2, %s256
        %s258 = smul.u32 16, %s26
        %p260 = scmp.eq.s32.totalorder %s28, 0
        // Predicated region
        $region41: #{tpu_custom_call.1} parent=31 // pred_check
          %p261 = pneg %p260
        $region42: #{tpu_custom_call.1} parent=31 // pred_check_branch
          %263 = sbr.rel (%p261) target = $region44
        $region43: #{tpu_custom_call.1} parent=31 // pred_region
          %264 = vst [vmem:[#allocation2] sm:$0xff] 0.0
          %265 = vst [vmem:[#allocation2 + $0x8] sm:$0xff] 0.0
          %266 = vst [vmem:[#allocation2 + $0x10] sm:$0xff] 0.0
          %267 = vst [vmem:[#allocation2 + $0x18] sm:$0xff] 0.0
          %268 = vst [vmem:[#allocation2 + $0x20] sm:$0xff] 0.0
          %269 = vst [vmem:[#allocation2 + $0x28] sm:$0xff] 0.0
          %270 = vst [vmem:[#allocation2 + $0x30] sm:$0xff] 0.0
          %271 = vst [vmem:[#allocation2 + $0x38] sm:$0xff] 0.0
          %272 = vst [vmem:[#allocation2 + $0x40] sm:$0xff] 0.0
          %273 = vst [vmem:[#allocation2 + $0x48] sm:$0xff] 0.0
          %274 = vst [vmem:[#allocation2 + $0x50] sm:$0xff] 0.0
          %275 = vst [vmem:[#allocation2 + $0x58] sm:$0xff] 0.0
          %276 = vst [vmem:[#allocation2 + $0x60] sm:$0xff] 0.0
          %277 = vst [vmem:[#allocation2 + $0x68] sm:$0xff] 0.0
          %278 = vst [vmem:[#allocation2 + $0x70] sm:$0xff] 0.0
          %279 = vst [vmem:[#allocation2 + $0x78] sm:$0xff] 0.0
        $region44: #{tpu_custom_call.1} parent=31 // pred_fallthru
          _
        %v280 = vld [vmem:[#allocation2] sm:$0xff]
        %v281 = vld [vmem:[#allocation2 + $0x8] sm:$0xff]
        %v282 = vld [vmem:[#allocation2 + $0x10] sm:$0xff]
        %v283 = vld [vmem:[#allocation2 + $0x18] sm:$0xff]
        %v284 = vld [vmem:[#allocation2 + $0x20] sm:$0xff]
        %v285 = vld [vmem:[#allocation2 + $0x28] sm:$0xff]
        %v286 = vld [vmem:[#allocation2 + $0x30] sm:$0xff]
        %v287 = vld [vmem:[#allocation2 + $0x38] sm:$0xff]
        %v288 = vld [vmem:[#allocation2 + $0x40] sm:$0xff]
        %v289 = vld [vmem:[#allocation2 + $0x48] sm:$0xff]
        %v290 = vld [vmem:[#allocation2 + $0x50] sm:$0xff]
        %v291 = vld [vmem:[#allocation2 + $0x58] sm:$0xff]
        %v292 = vld [vmem:[#allocation2 + $0x60] sm:$0xff]
        %v293 = vld [vmem:[#allocation2 + $0x68] sm:$0xff]
        %v294 = vld [vmem:[#allocation2 + $0x70] sm:$0xff]
        %v295 = vld [vmem:[#allocation2 + $0x78] sm:$0xff]
        %v296 = vld [vmem:[%s222] sm:$0xff]
        %v297 = vld [vmem:[%s222 + $0x8] sm:$0xf]
        %v298 = vld [vmem:[%s222 + $0xc] sm:$0xff]
        %v299 = vld [vmem:[%s222 + $0x14] sm:$0xf]
        %v300 = vld [vmem:[%s222 + $0x18] sm:$0xff]
        %v301 = vld [vmem:[%s222 + $0x20] sm:$0xf]
        %v302 = vld [vmem:[%s222 + $0x24] sm:$0xff]
        %v303 = vld [vmem:[%s222 + $0x2c] sm:$0xf]
        %v304 = vld [vmem:[%s222 + $0x30] sm:$0xff]
        %v305 = vld [vmem:[%s222 + $0x38] sm:$0xf]
        %v306 = vld [vmem:[%s222 + $0x3c] sm:$0xff]
        %v307 = vld [vmem:[%s222 + $0x44] sm:$0xf]
        %v308 = vld [vmem:[%s222 + $0x48] sm:$0xff]
        %v309 = vld [vmem:[%s222 + $0x50] sm:$0xf]
        %v310 = vld [vmem:[%s222 + $0x54] sm:$0xff]
        %v311 = vld [vmem:[%s222 + $0x5c] sm:$0xf]
        %v312 = vld [vmem:[%s222 + $0x60] sm:$0xff]
        %v313 = vld [vmem:[%s222 + $0x68] sm:$0xf]
        %v314 = vld [vmem:[%s222 + $0x6c] sm:$0xff]
        %v315 = vld [vmem:[%s222 + $0x74] sm:$0xf]
        %v316 = vld [vmem:[%s222 + $0x78] sm:$0xff]
        %v317 = vld [vmem:[%s222 + $0x80] sm:$0xf]
        %v318 = vld [vmem:[%s222 + $0x84] sm:$0xff]
        %v319 = vld [vmem:[%s222 + $0x8c] sm:$0xf]
        %v320 = vld [vmem:[%s222 + $0x90] sm:$0xff]
        %v321 = vld [vmem:[%s222 + $0x98] sm:$0xf]
        %v322 = vld [vmem:[%s222 + $0x9c] sm:$0xff]
        %v323 = vld [vmem:[%s222 + $0xa4] sm:$0xf]
        %v324 = vld [vmem:[%s222 + $0xa8] sm:$0xff]
        %v325 = vld [vmem:[%s222 + $0xb0] sm:$0xf]
        %v326 = vld [vmem:[%s222 + $0xb4] sm:$0xff]
        %v327 = vld [vmem:[%s222 + $0xbc] sm:$0xf]
        %v328 = vld [vmem:[#allocation6] sm:$0xf]
        %v329 = vld [vmem:[#allocation6 + $0x4] sm:$0xf]
        %v330 = vld [vmem:[#allocation6 + $0x8] sm:$0xf]
        %v331 = vld [vmem:[#allocation6 + $0xc] sm:$0xf]
        %v332 = vld [vmem:[#allocation6 + $0x10] sm:$0xf]
        %v333 = vld [vmem:[#allocation6 + $0x14] sm:$0xf]
        %v334 = vld [vmem:[#allocation6 + $0x18] sm:$0xf]
        %v335 = vld [vmem:[#allocation6 + $0x1c] sm:$0xf]
        %v336 = vld [vmem:[#allocation6 + $0x20] sm:$0xf]
        %v337 = vld [vmem:[#allocation6 + $0x24] sm:$0xf]
        %v338 = vld [vmem:[#allocation6 + $0x28] sm:$0xf]
        %v339 = vld [vmem:[#allocation6 + $0x2c] sm:$0xf]
        %v340 = vld [vmem:[#allocation6 + $0x30] sm:$0xf]
        %v341 = vld [vmem:[#allocation6 + $0x34] sm:$0xf]
        %v342 = vld [vmem:[#allocation6 + $0x38] sm:$0xf]
        %v343 = vld [vmem:[#allocation6 + $0x3c] sm:$0xf]
        %v344 = vld [vmem:[#allocation6 + $0x40] sm:$0xf]
        %v345 = vld [vmem:[#allocation6 + $0x44] sm:$0xf]
        %v346 = vld [vmem:[#allocation6 + $0x48] sm:$0xf]
        %v347 = vld [vmem:[#allocation6 + $0x4c] sm:$0xf]
        %v348 = vld [vmem:[#allocation6 + $0x50] sm:$0xf]
        %v349 = vld [vmem:[#allocation6 + $0x54] sm:$0xf]
        %v350 = vld [vmem:[#allocation6 + $0x58] sm:$0xf]
        %v351 = vld [vmem:[#allocation6 + $0x5c] sm:$0xf]
        %v352 = vld [vmem:[#allocation6 + $0x60] sm:$0xf]
        %v353 = vld [vmem:[#allocation6 + $0x64] sm:$0xf]
        %v354 = vld [vmem:[#allocation6 + $0x68] sm:$0xf]
        %v355 = vld [vmem:[#allocation6 + $0x6c] sm:$0xf]
        %v356 = vld [vmem:[#allocation6 + $0x70] sm:$0xf]
        %v357 = vld [vmem:[#allocation6 + $0x74] sm:$0xf]
        %v358 = vld [vmem:[#allocation6 + $0x78] sm:$0xf]
        %v359 = vld [vmem:[#allocation6 + $0x7c] sm:$0xf]
        %v360 = vld [vmem:[#allocation6 + $0x80] sm:$0xf]
        %v361 = vld [vmem:[#allocation6 + $0x84] sm:$0xf]
        %v362 = vld [vmem:[#allocation6 + $0x88] sm:$0xf]
        %v363 = vld [vmem:[#allocation6 + $0x8c] sm:$0xf]
        %v364 = vld [vmem:[#allocation6 + $0x90] sm:$0xf]
        %v365 = vld [vmem:[#allocation6 + $0x94] sm:$0xf]
        %v366 = vld [vmem:[#allocation6 + $0x98] sm:$0xf]
        %v367 = vld [vmem:[#allocation6 + $0x9c] sm:$0xf]
        %v368 = vld [vmem:[#allocation6 + $0xa0] sm:$0xf]
        %v369 = vld [vmem:[#allocation6 + $0xa4] sm:$0xf]
        %v370 = vld [vmem:[#allocation6 + $0xa8] sm:$0xf]
        %v371 = vld [vmem:[#allocation6 + $0xac] sm:$0xf]
        %v372 = vld [vmem:[#allocation6 + $0xb0] sm:$0xf]
        %v373 = vld [vmem:[#allocation6 + $0xb4] sm:$0xf]
        %v374 = vld [vmem:[#allocation6 + $0xb8] sm:$0xf]
        %v375 = vld [vmem:[#allocation6 + $0xbc] sm:$0xf]
        %v408 = vunpack.c.l.b16 %v296
        %v409 = vunpack.c.h.b16 %v296
        %v410 = vunpack.c.l.b16 %v297
        %v411 = vunpack.c.l.b16 %v298
        %v412 = vunpack.c.h.b16 %v298
        %v413 = vunpack.c.l.b16 %v299
        %v414 = vunpack.c.l.b16 %v300
        %v415 = vunpack.c.h.b16 %v300
        %v416 = vunpack.c.l.b16 %v301
        %v417 = vunpack.c.l.b16 %v302
        %v418 = vunpack.c.h.b16 %v302
        %v419 = vunpack.c.l.b16 %v303
        %v420 = vunpack.c.l.b16 %v304
        %v421 = vunpack.c.h.b16 %v304
        %v422 = vunpack.c.l.b16 %v305
        %v423 = vunpack.c.l.b16 %v306
        %v424 = vunpack.c.h.b16 %v306
        %v425 = vunpack.c.l.b16 %v307
        %v426 = vunpack.c.l.b16 %v308
        %v427 = vunpack.c.h.b16 %v308
        %v428 = vunpack.c.l.b16 %v309
        %v429 = vunpack.c.l.b16 %v310
        %v430 = vunpack.c.h.b16 %v310
        %v431 = vunpack.c.l.b16 %v311
        %v432 = vunpack.c.l.b16 %v312
        %v433 = vunpack.c.h.b16 %v312
        %v434 = vunpack.c.l.b16 %v313
        %v435 = vunpack.c.l.b16 %v314
        %v436 = vunpack.c.h.b16 %v314
        %v437 = vunpack.c.l.b16 %v315
        %v438 = vunpack.c.l.b16 %v316
        %v439 = vunpack.c.h.b16 %v316
        %v440 = vunpack.c.l.b16 %v317
        %v441 = vunpack.c.l.b16 %v318
        %v442 = vunpack.c.h.b16 %v318
        %v443 = vunpack.c.l.b16 %v319
        %v444 = vunpack.c.l.b16 %v320
        %v445 = vunpack.c.h.b16 %v320
        %v446 = vunpack.c.l.b16 %v321
        %v447 = vunpack.c.l.b16 %v322
        %v448 = vunpack.c.h.b16 %v322
        %v449 = vunpack.c.l.b16 %v323
        %v450 = vunpack.c.l.b16 %v324
        %v451 = vunpack.c.h.b16 %v324
        %v452 = vunpack.c.l.b16 %v325
        %v453 = vunpack.c.l.b16 %v326
        %v454 = vunpack.c.h.b16 %v326
        %v455 = vunpack.c.l.b16 %v327
        %v456 = vpack.c.b16 %v411, %v408
        %v457 = vpack.c.b16 %v412, %v409
        %v458 = vpack.c.b16 %v413, %v410
        %v459 = vpack.c.b16 %v417, %v414
        %v460 = vpack.c.b16 %v418, %v415
        %v461 = vpack.c.b16 %v419, %v416
        %v462 = vpack.c.b16 %v423, %v420
        %v463 = vpack.c.b16 %v424, %v421
        %v464 = vpack.c.b16 %v425, %v422
        %v465 = vpack.c.b16 %v429, %v426
        %v466 = vpack.c.b16 %v430, %v427
        %v467 = vpack.c.b16 %v431, %v428
        %v468 = vpack.c.b16 %v435, %v432
        %v469 = vpack.c.b16 %v436, %v433
        %v470 = vpack.c.b16 %v437, %v434
        %v471 = vpack.c.b16 %v441, %v438
        %v472 = vpack.c.b16 %v442, %v439
        %v473 = vpack.c.b16 %v443, %v440
        %v474 = vpack.c.b16 %v447, %v444
        %v475 = vpack.c.b16 %v448, %v445
        %v476 = vpack.c.b16 %v449, %v446
        %v477 = vpack.c.b16 %v453, %v450
        %v478 = vpack.c.b16 %v454, %v451
        %v479 = vpack.c.b16 %v455, %v452
        %v552 = vunpack.c.l.b16 %v328
        %v553 = vunpack.c.l.b16 %v329
        %v554 = vunpack.c.l.b16 %v330
        %v555 = vunpack.c.l.b16 %v331
        %v556 = vunpack.c.l.b16 %v332
        %v557 = vunpack.c.l.b16 %v333
        %v558 = vunpack.c.l.b16 %v334
        %v559 = vunpack.c.l.b16 %v335
        %v560 = vunpack.c.l.b16 %v336
        %v561 = vunpack.c.l.b16 %v337
        %v562 = vunpack.c.l.b16 %v338
        %v563 = vunpack.c.l.b16 %v339
        %v564 = vunpack.c.l.b16 %v340
        %v565 = vunpack.c.l.b16 %v341
        %v566 = vunpack.c.l.b16 %v342
        %v567 = vunpack.c.l.b16 %v343
        %v568 = vunpack.c.l.b16 %v344
        %v569 = vunpack.c.l.b16 %v345
        %v570 = vunpack.c.l.b16 %v346
        %v571 = vunpack.c.l.b16 %v347
        %v572 = vunpack.c.l.b16 %v348
        %v573 = vunpack.c.l.b16 %v349
        %v574 = vunpack.c.l.b16 %v350
        %v575 = vunpack.c.l.b16 %v351
        %v576 = vunpack.c.l.b16 %v352
        %v577 = vunpack.c.l.b16 %v353
        %v578 = vunpack.c.l.b16 %v354
        %v579 = vunpack.c.l.b16 %v355
        %v580 = vunpack.c.l.b16 %v356
        %v581 = vunpack.c.l.b16 %v357
        %v582 = vunpack.c.l.b16 %v358
        %v583 = vunpack.c.l.b16 %v359
        %v584 = vunpack.c.l.b16 %v360
        %v585 = vunpack.c.l.b16 %v361
        %v586 = vunpack.c.l.b16 %v362
        %v587 = vunpack.c.l.b16 %v363
        %v588 = vunpack.c.l.b16 %v364
        %v589 = vunpack.c.l.b16 %v365
        %v590 = vunpack.c.l.b16 %v366
        %v591 = vunpack.c.l.b16 %v367
        %v592 = vunpack.c.l.b16 %v368
        %v593 = vunpack.c.l.b16 %v369
        %v594 = vunpack.c.l.b16 %v370
        %v595 = vunpack.c.l.b16 %v371
        %v596 = vunpack.c.l.b16 %v372
        %v597 = vunpack.c.l.b16 %v373
        %v598 = vunpack.c.l.b16 %v374
        %v599 = vunpack.c.l.b16 %v375
        %v600 = vpack.c.b16 %v553, %v552
        %v601 = vpack.c.b16 %v555, %v554
        %v602 = vpack.c.b16 %v557, %v556
        %v603 = vpack.c.b16 %v559, %v558
        %v604 = vpack.c.b16 %v561, %v560
        %v605 = vpack.c.b16 %v563, %v562
        %v606 = vpack.c.b16 %v565, %v564
        %v607 = vpack.c.b16 %v567, %v566
        %v608 = vpack.c.b16 %v569, %v568
        %v609 = vpack.c.b16 %v571, %v570
        %v610 = vpack.c.b16 %v573, %v572
        %v611 = vpack.c.b16 %v575, %v574
        %v612 = vpack.c.b16 %v577, %v576
        %v613 = vpack.c.b16 %v579, %v578
        %v614 = vpack.c.b16 %v581, %v580
        %v615 = vpack.c.b16 %v583, %v582
        %v616 = vpack.c.b16 %v585, %v584
        %v617 = vpack.c.b16 %v587, %v586
        %v618 = vpack.c.b16 %v589, %v588
        %v619 = vpack.c.b16 %v591, %v590
        %v620 = vpack.c.b16 %v593, %v592
        %v621 = vpack.c.b16 %v595, %v594
        %v622 = vpack.c.b16 %v597, %v596
        %v623 = vpack.c.b16 %v599, %v598
        %648 = vmatprep.subr.bf16.mxu0 0
        %649 = vmatpush1.bf16.msra.mxu0 %v600
        %650 = vmatprep.subr.bf16.mxu0 0
        %651 = vmatpush1.bf16.msra.mxu0 %v601
        %652 = vmatprep.subr.bf16.mxu0 0
        %653 = vmatpush1.bf16.msra.mxu0 %v602
        %654 = vmatprep.subr.bf16.mxu0 0
        %655 = vmatpush1.bf16.msra.mxu0 %v603
        %656 = vmatprep.subr.bf16.mxu0 0
        %657 = vmatpush1.bf16.msra.mxu0 %v604
        %658 = vmatprep.subr.bf16.mxu0 0
        %659 = vmatpush1.bf16.msra.mxu0 %v605
        %660 = vmatprep.subr.bf16.mxu0 0
        %661 = vmatpush1.bf16.msra.mxu0 %v606
        %662 = vmatprep.subr.bf16.mxu0 0
        %663 = vmatpush1.bf16.msra.mxu0 %v607
        %664 = vmatprep.subr.bf16.mxu0 0
        %665 = vmatpush1.bf16.msra.mxu0 %v608
        %666 = vmatprep.subr.bf16.mxu0 0
        %667 = vmatpush1.bf16.msra.mxu0 %v609
        %668 = vmatprep.subr.bf16.mxu0 0
        %669 = vmatpush1.bf16.msra.mxu0 %v610
        %670 = vmatprep.subr.bf16.mxu0 0
        %671 = vmatpush1.bf16.msra.mxu0 %v611
        %672 = vmatprep.subr.bf16.mxu0 0
        %673 = vmatpush1.bf16.msra.mxu0 %v612
        %674 = vmatprep.subr.bf16.mxu0 0
        %675 = vmatpush1.bf16.msra.mxu0 %v613
        %676 = vmatprep.subr.bf16.mxu0 0
        %677 = vmatpush1.bf16.msra.mxu0 %v614
        %678 = vmatprep.subr.bf16.mxu0 0
        %679 = vmatpush1.bf16.msra.mxu0 %v615
        %680 = vmatprep.mubr.bf16.mxu0 %v457
        %681 = vmatmul.mubr.bf16.gmra.mrb[0].mxu0 %v456
        %v682 = vpop.f32.mrb[0].mxu0
        %v683 = vadd.f32 0.0, %v682
        %v684 = vpop.f32.mrb[0].mxu0
        %v685 = vpop.f32.mrb[0].mxu0
        %v686 = vadd.f32 0.0, %v685
        %v687 = vpop.f32.mrb[0].mxu0
        %688 = vmatprep.mubr.bf16.mxu0 %v460
        %689 = vmatmul.mubr.bf16.gmra.mrb[0].mxu0 %v459
        %v690 = vpop.f32.mrb[0].mxu0
        %v691 = vadd.f32 0.0, %v690
        %v692 = vpop.f32.mrb[0].mxu0
        %v693 = vpop.f32.mrb[0].mxu0
        %v694 = vadd.f32 0.0, %v693
        %v695 = vpop.f32.mrb[0].mxu0
        %696 = vmatprep.mubr.bf16.mxu0 %v463
        %697 = vmatmul.mubr.bf16.gmra.mrb[0].mxu0 %v462
        %v698 = vpop.f32.mrb[0].mxu0
        %v699 = vadd.f32 0.0, %v698
        %v700 = vpop.f32.mrb[0].mxu0
        %v701 = vpop.f32.mrb[0].mxu0
        %v702 = vadd.f32 0.0, %v701
        %v703 = vpop.f32.mrb[0].mxu0
        %704 = vmatprep.mubr.bf16.mxu0 %v466
        %705 = vmatmul.mubr.bf16.gmra.mrb[0].mxu0 %v465
        %v706 = vpop.f32.mrb[0].mxu0
        %v707 = vadd.f32 0.0, %v706
        %v708 = vpop.f32.mrb[0].mxu0
        %v709 = vpop.f32.mrb[0].mxu0
        %v710 = vadd.f32 0.0, %v709
        %v711 = vpop.f32.mrb[0].mxu0
        %712 = vmatprep.mubr.bf16.mxu0 %v469
        %713 = vmatmul.mubr.bf16.gmra.mrb[0].mxu0 %v468
        %v714 = vpop.f32.mrb[0].mxu0
        %v715 = vadd.f32 0.0, %v714
        %v716 = vpop.f32.mrb[0].mxu0
        %v717 = vpop.f32.mrb[0].mxu0
        %v718 = vadd.f32 0.0, %v717
        %v719 = vpop.f32.mrb[0].mxu0
        %720 = vmatprep.mubr.bf16.mxu0 %v472
        %721 = vmatmul.mubr.bf16.gmra.mrb[0].mxu0 %v471
        %v722 = vpop.f32.mrb[0].mxu0
        %v723 = vadd.f32 0.0, %v722
        %v724 = vpop.f32.mrb[0].mxu0
        %v725 = vpop.f32.mrb[0].mxu0
        %v726 = vadd.f32 0.0, %v725
        %v727 = vpop.f32.mrb[0].mxu0
        %728 = vmatprep.mubr.bf16.mxu0 %v475
        %729 = vmatmul.mubr.bf16.gmra.mrb[0].mxu0 %v474
        %v730 = vpop.f32.mrb[0].mxu0
        %v731 = vadd.f32 0.0, %v730
        %v732 = vpop.f32.mrb[0].mxu0
        %v733 = vpop.f32.mrb[0].mxu0
        %v734 = vadd.f32 0.0, %v733
        %v735 = vpop.f32.mrb[0].mxu0
        %736 = vmatprep.mubr.bf16.mxu0 %v478
        %737 = vmatmul.mubr.bf16.gmra.mrb[0].mxu0 %v477
        %v738 = vpop.f32.mrb[0].mxu0
        %v739 = vadd.f32 0.0, %v738
        %v740 = vpop.f32.mrb[0].mxu0
        %v741 = vpop.f32.mrb[0].mxu0
        %v742 = vadd.f32 0.0, %v741
        %v743 = vpop.f32.mrb[0].mxu0
        %744 = vdwg.mxu0
        %745 = vmatprep.subr.bf16.mxu0 0
        %746 = vmatpush1.bf16.msra.mxu0 %v616
        %747 = vmatprep.subr.bf16.mxu0 0
        %748 = vmatpush1.bf16.msra.mxu0 %v617
        %749 = vmatprep.subr.bf16.mxu0 0
        %750 = vmatpush1.bf16.msra.mxu0 %v618
        %751 = vmatprep.subr.bf16.mxu0 0
        %752 = vmatpush1.bf16.msra.mxu0 %v619
        %753 = vmatprep.subr.bf16.mxu0 0
        %754 = vmatpush1.bf16.msra.mxu0 %v620
        %755 = vmatprep.subr.bf16.mxu0 0
        %756 = vmatpush1.bf16.msra.mxu0 %v621
        %757 = vmatprep.subr.bf16.mxu0 0
        %758 = vmatpush1.bf16.msra.mxu0 %v622
        %759 = vmatprep.subr.bf16.mxu0 0
        %760 = vmatpush1.bf16.msra.mxu0 %v623
        %761 = vmatprep.subr.bf16.mxu0 0
        %762 = vmatpush1.bf16.msra.mxu0 0
        %763 = vmatprep.subr.bf16.mxu0 0
        %764 = vmatpush1.bf16.msra.mxu0 0
        %765 = vmatprep.subr.bf16.mxu0 0
        %766 = vmatpush1.bf16.msra.mxu0 0
        %767 = vmatprep.subr.bf16.mxu0 0
        %768 = vmatpush1.bf16.msra.mxu0 0
        %769 = vmatprep.subr.bf16.mxu0 0
        %770 = vmatpush1.bf16.msra.mxu0 0
        %771 = vmatprep.subr.bf16.mxu0 0
        %772 = vmatpush1.bf16.msra.mxu0 0
        %773 = vmatprep.subr.bf16.mxu0 0
        %774 = vmatpush1.bf16.msra.mxu0 0
        %775 = vmatprep.subr.bf16.mxu0 0
        %776 = vmatpush1.bf16.msra.mxu0 0
        %777 = vmatprep.mubr.bf16.mxu0 0
        %778 = vmatmul.mubr.bf16.gmra.mrb[0].mxu0 %v458
        %v779 = vpop.f32.mrb[0].mxu0
        %v780 = vadd.f32 %v683, %v779
        %v781 = vpop.f32.mrb[0].mxu0
        %v782 = vpop.f32.mrb[0].mxu0
        %v783 = vadd.f32 %v686, %v782
        %v784 = vpop.f32.mrb[0].mxu0
        %785 = vmatprep.mubr.bf16.mxu0 0
        %786 = vmatmul.mubr.bf16.gmra.mrb[0].mxu0 %v461
        %v787 = vpop.f32.mrb[0].mxu0
        %v788 = vadd.f32 %v691, %v787
        %v789 = vpop.f32.mrb[0].mxu0
        %v790 = vpop.f32.mrb[0].mxu0
        %v791 = vadd.f32 %v694, %v790
        %v792 = vpop.f32.mrb[0].mxu0
        %793 = vmatprep.mubr.bf16.mxu0 0
        %794 = vmatmul.mubr.bf16.gmra.mrb[0].mxu0 %v464
        %v795 = vpop.f32.mrb[0].mxu0
        %v796 = vadd.f32 %v699, %v795
        %v797 = vpop.f32.mrb[0].mxu0
        %v798 = vpop.f32.mrb[0].mxu0
        %v799 = vadd.f32 %v702, %v798
        %v800 = vpop.f32.mrb[0].mxu0
        %801 = vmatprep.mubr.bf16.mxu0 0
        %802 = vmatmul.mubr.bf16.gmra.mrb[0].mxu0 %v467
        %v803 = vpop.f32.mrb[0].mxu0
        %v804 = vadd.f32 %v707, %v803
        %v805 = vpop.f32.mrb[0].mxu0
        %v806 = vpop.f32.mrb[0].mxu0
        %v807 = vadd.f32 %v710, %v806
        %v808 = vpop.f32.mrb[0].mxu0
        %809 = vmatprep.mubr.bf16.mxu0 0
        %810 = vmatmul.mubr.bf16.gmra.mrb[0].mxu0 %v470
        %v811 = vpop.f32.mrb[0].mxu0
        %v812 = vadd.f32 %v715, %v811
        %v813 = vpop.f32.mrb[0].mxu0
        %v814 = vpop.f32.mrb[0].mxu0
        %v815 = vadd.f32 %v718, %v814
        %v816 = vpop.f32.mrb[0].mxu0
        %817 = vmatprep.mubr.bf16.mxu0 0
        %818 = vmatmul.mubr.bf16.gmra.mrb[0].mxu0 %v473
        %v819 = vpop.f32.mrb[0].mxu0
        %v820 = vadd.f32 %v723, %v819
        %v821 = vpop.f32.mrb[0].mxu0
        %v822 = vpop.f32.mrb[0].mxu0
        %v823 = vadd.f32 %v726, %v822
        %v824 = vpop.f32.mrb[0].mxu0
        %825 = vmatprep.mubr.bf16.mxu0 0
        %826 = vmatmul.mubr.bf16.gmra.mrb[0].mxu0 %v476
        %v827 = vpop.f32.mrb[0].mxu0
        %v828 = vadd.f32 %v731, %v827
        %v829 = vpop.f32.mrb[0].mxu0
        %v830 = vpop.f32.mrb[0].mxu0
        %v831 = vadd.f32 %v734, %v830
        %v832 = vpop.f32.mrb[0].mxu0
        %833 = vmatprep.mubr.bf16.mxu0 0
        %834 = vmatmul.mubr.bf16.gmra.mrb[0].mxu0 %v479
        %v835 = vpop.f32.mrb[0].mxu0
        %v836 = vadd.f32 %v739, %v835
        %v837 = vpop.f32.mrb[0].mxu0
        %v838 = vpop.f32.mrb[0].mxu0
        %v839 = vadd.f32 %v742, %v838
        %v840 = vpop.f32.mrb[0].mxu0
        %841 = vdwg.mxu0
        %v842 = vadd.f32 %v280, %v780
        %v843 = vadd.f32 %v281, %v783
        %v844 = vadd.f32 %v282, %v788
        %v845 = vadd.f32 %v283, %v791
        %v846 = vadd.f32 %v284, %v796
        %v847 = vadd.f32 %v285, %v799
        %v848 = vadd.f32 %v286, %v804
        %v849 = vadd.f32 %v287, %v807
        %v850 = vadd.f32 %v288, %v812
        %v851 = vadd.f32 %v289, %v815
        %v852 = vadd.f32 %v290, %v820
        %v853 = vadd.f32 %v291, %v823
        %v854 = vadd.f32 %v292, %v828
        %v855 = vadd.f32 %v293, %v831
        %v856 = vadd.f32 %v294, %v836
        %v857 = vadd.f32 %v295, %v839
        %858 = vst [vmem:[#allocation2] sm:$0xff] %v842
        %859 = vst [vmem:[#allocation2 + $0x8] sm:$0xff] %v843
        %860 = vst [vmem:[#allocation2 + $0x10] sm:$0xff] %v844
        %861 = vst [vmem:[#allocation2 + $0x18] sm:$0xff] %v845
        %862 = vst [vmem:[#allocation2 + $0x20] sm:$0xff] %v846
        %863 = vst [vmem:[#allocation2 + $0x28] sm:$0xff] %v847
        %864 = vst [vmem:[#allocation2 + $0x30] sm:$0xff] %v848
        %865 = vst [vmem:[#allocation2 + $0x38] sm:$0xff] %v849
        %866 = vst [vmem:[#allocation2 + $0x40] sm:$0xff] %v850
        %867 = vst [vmem:[#allocation2 + $0x48] sm:$0xff] %v851
        %868 = vst [vmem:[#allocation2 + $0x50] sm:$0xff] %v852
        %869 = vst [vmem:[#allocation2 + $0x58] sm:$0xff] %v853
        %870 = vst [vmem:[#allocation2 + $0x60] sm:$0xff] %v854
        %871 = vst [vmem:[#allocation2 + $0x68] sm:$0xff] %v855
        %872 = vst [vmem:[#allocation2 + $0x70] sm:$0xff] %v856
        %873 = vst [vmem:[#allocation2 + $0x78] sm:$0xff] %v857
        // Predicated region
        $region45: #{tpu_custom_call.1} parent=31 // pred_check
          %p874 = pneg %p260
        $region46: #{tpu_custom_call.1} parent=31 // pred_check_branch
          %876 = sbr.rel (%p874) target = $region48
        $region47: #{tpu_custom_call.1} parent=31 // pred_region
          %v877 = vld [vmem:[#allocation2] sm:$0xff]
          %v878 = vld [vmem:[#allocation2 + $0x8] sm:$0xff]
          %v879 = vld [vmem:[#allocation2 + $0x10] sm:$0xff]
          %v880 = vld [vmem:[#allocation2 + $0x18] sm:$0xff]
          %v881 = vld [vmem:[#allocation2 + $0x20] sm:$0xff]
          %v882 = vld [vmem:[#allocation2 + $0x28] sm:$0xff]
          %v883 = vld [vmem:[#allocation2 + $0x30] sm:$0xff]
          %v884 = vld [vmem:[#allocation2 + $0x38] sm:$0xff]
          %v885 = vld [vmem:[#allocation2 + $0x40] sm:$0xff]
          %v886 = vld [vmem:[#allocation2 + $0x48] sm:$0xff]
          %v887 = vld [vmem:[#allocation2 + $0x50] sm:$0xff]
          %v888 = vld [vmem:[#allocation2 + $0x58] sm:$0xff]
          %v889 = vld [vmem:[#allocation2 + $0x60] sm:$0xff]
          %v890 = vld [vmem:[#allocation2 + $0x68] sm:$0xff]
          %v891 = vld [vmem:[#allocation2 + $0x70] sm:$0xff]
          %v892 = vld [vmem:[#allocation2 + $0x78] sm:$0xff]
          %v893 = vld [vmem:[%s257] sm:$0x1]
          %v895 = vlaneseq
          %v896 = vshrl.u32 %v895, 7
          %v897 = vsub.s32 0, %v896
          %v898 = vrot.slane %v893, %v897
          %v900 = vadd.f32 %v877, %v898
          %v901 = vadd.f32 %v878, %v898
          %v902 = vadd.f32 %v879, %v898
          %v903 = vadd.f32 %v880, %v898
          %v904 = vadd.f32 %v881, %v898
          %v905 = vadd.f32 %v882, %v898
          %v906 = vadd.f32 %v883, %v898
          %v907 = vadd.f32 %v884, %v898
          %v908 = vadd.f32 %v885, %v898
          %v909 = vadd.f32 %v886, %v898
          %v910 = vadd.f32 %v887, %v898
          %v911 = vadd.f32 %v888, %v898
          %v912 = vadd.f32 %v889, %v898
          %v913 = vadd.f32 %v890, %v898
          %v914 = vadd.f32 %v891, %v898
          %v915 = vadd.f32 %v892, %v898
          %v916 = vmax.f32 %v900, 0.0
          %v917 = vmax.f32 %v901, 0.0
          %v918 = vmax.f32 %v902, 0.0
          %v919 = vmax.f32 %v903, 0.0
          %v920 = vmax.f32 %v904, 0.0
          %v921 = vmax.f32 %v905, 0.0
          %v922 = vmax.f32 %v906, 0.0
          %v923 = vmax.f32 %v907, 0.0
          %v924 = vmax.f32 %v908, 0.0
          %v925 = vmax.f32 %v909, 0.0
          %v926 = vmax.f32 %v910, 0.0
          %v927 = vmax.f32 %v911, 0.0
          %v928 = vmax.f32 %v912, 0.0
          %v929 = vmax.f32 %v913, 0.0
          %v930 = vmax.f32 %v914, 0.0
          %v931 = vmax.f32 %v915, 0.0
          %932 = vst [vmem:[%s251] sm:$0xff] %v916
          %933 = vst [vmem:[%s251 + $0x8] sm:$0xff] %v917
          %934 = vst [vmem:[%s251 + $0x10] sm:$0xff] %v918
          %935 = vst [vmem:[%s251 + $0x18] sm:$0xff] %v919
          %936 = vst [vmem:[%s251 + $0x20] sm:$0xff] %v920
          %937 = vst [vmem:[%s251 + $0x28] sm:$0xff] %v921
          %938 = vst [vmem:[%s251 + $0x30] sm:$0xff] %v922
          %939 = vst [vmem:[%s251 + $0x38] sm:$0xff] %v923
          %940 = vst [vmem:[%s251 + $0x40] sm:$0xff] %v924
          %941 = vst [vmem:[%s251 + $0x48] sm:$0xff] %v925
          %942 = vst [vmem:[%s251 + $0x50] sm:$0xff] %v926
          %943 = vst [vmem:[%s251 + $0x58] sm:$0xff] %v927
          %944 = vst [vmem:[%s251 + $0x60] sm:$0xff] %v928
          %945 = vst [vmem:[%s251 + $0x68] sm:$0xff] %v929
          %946 = vst [vmem:[%s251 + $0x70] sm:$0xff] %v930
          %947 = vst [vmem:[%s251 + $0x78] sm:$0xff] %v931
        $region48: #{tpu_custom_call.1} parent=31 // pred_fallthru
          _
        %s948 = sand.u32 %s132, 1
        %s949 = scalar_lea.sflag [#allocation5], %s948
        %s950 = sand.u32 %s132, 1
        %s951 = smul.addr %s950, 128
        %s952 = scalar_lea.vmem [#allocation8], %s951
        // Predicated region
        $region49: #{tpu_custom_call.1} parent=31 // pred_check
          %p953 = pneg %p142
        $region50: #{tpu_custom_call.1} parent=31 // pred_check_branch
          %955 = sbr.rel (%p953) target = $region52
        $region51: #{tpu_custom_call.1} parent=31 // pred_region
          %s956 = smul.u32 16, %s26
          %s958 = ssub.s32 2048, 2048
          %959 = vsyncadd %s949, %s958
          %s960 = sadd.s32 %s27, %s956
          %s961 = smul.addr %s960, 128
          %s962 = scalar_lea.hbm %s3, %s961
          %s963 = sshll.u32 %s952, 4
          %s964 = int_to_ptr.vmem [resolvable:$true] %s963
          %969 = dma.vmem_to_hbm [thread:$0]  %s964, 2048, %s962, %s949, 128, 128, 8
        $region52: #{tpu_custom_call.1} parent=31 // pred_fallthru
          _
      $region32: #{tpu_custom_call.1} parent=5 // pred_fallthru
        _
      %p970 = scmp.le.s32.totalorder 2, %s16
      // Predicated region
      $region53: #{tpu_custom_call.1} parent=5 // pred_check
        %p971 = pneg %p970
      $region54: #{tpu_custom_call.1} parent=5 // pred_check_branch
        %973 = sbr.rel (%p971) target = $region56
      $region55: #{tpu_custom_call.1} parent=5 // pred_region
        %s974 = ssub.s32 %s16, 2
        // Predicated region
        $region57: #{tpu_custom_call.1} parent=55 // pred_check
          %p975 = pneg %p148
        $region58: #{tpu_custom_call.1} parent=55 // pred_check_branch
          %977 = sbr.rel (%p975) target = $region60
        $region59: #{tpu_custom_call.1} parent=55 // pred_region
          %s978 = sand.u32 %s133, 1
          %s979 = scalar_lea.sflag [#allocation5], %s978
          %s980 = sand.u32 %s133, 1
          %s981 = smul.addr %s980, 128
          %s982 = scalar_lea.vmem [#allocation8], %s981
          %983 = dma.done %s979, 2048
        $region60: #{tpu_custom_call.1} parent=55 // pred_fallthru
          _
      $region56: #{tpu_custom_call.1} parent=5 // pred_fallthru
        _
    $region6: #{tpu_custom_call.1} parent=1 // loop_footer
      %s20 = sadd.s32 1, %s16
    $region7: #{tpu_custom_call.1} parent=1 // loop_footer_branch
      %15 = sbr.rel target = $region3
    $region8: #{tpu_custom_call.1} parent=1 // loop_exit
      _
    %984 = vsyncpa [#allocation4], 1
    %s985 = scalar_lea.sflag [#allocation4], 1
    %986 = vsyncpa %s985, 1
    %987 = vsyncpa [#allocation7], 1
    %988 = vsyncpa [#allocation5], 1
    %s989 = scalar_lea.sflag [#allocation5], 1
    %990 = vsyncpa %s989, 1

</llo_original>
